<compile_context>
chip_gen: v5e
topology: v5e:2x2
jax: 0.10.0
libtpu: 0.0.40
codegen_flags: <defaults>
</compile_context>

<pallas_src>
import math
import functools

import numpy as np
import jax
import jax.numpy as jnp
from jax.experimental import pallas as pl
from jax.experimental.pallas import tpu as pltpu


def _embed_kernel(wf_ref, x_ref, out_ref, basis_ref, *,
                  tb, F, L, use_recurrence, wdelta, compute_dtype):
    # wf_ref:    (F, 1)      2*pi*time_scale*freqs           (shared, loaded once)
    # x_ref:     (TB, C, L)  raw input block: row 0 = times, rows 1: = values
    # out_ref:   (TB, 2*NC, F)  rows [0:NC)=sin proj, rows [NC:2NC)=cos proj
    # basis_ref: (2F, L) f32 VMEM scratch: rows [0:F)=sin basis, rows [F:2F)=cos basis

    # Hoisted broadcasts (shared by all TB elements of this grid step).
    if use_recurrence:
        wf0_b = jnp.broadcast_to(wf_ref[0:8, :], (8, L))       # first 8 angular freqs
        n_groups = F // 8
    else:
        wf_b = jnp.broadcast_to(wf_ref[...], (F, L))

    def body(i, carry):
        xi = x_ref[i].astype(jnp.float32)                      # (C, L), cast after DMA
        xs_row = xi[0:1, :]                                    # (1, L) time coords, lane-dense
        ys_i = xi[1:, :]                                       # (NC, L) value channels

        if use_recurrence:
            # Group 0 (freqs 0..7) via EUP, then rotate by the fixed per-lane step angle
            # wdelta*xs for every further group of 8 frequencies (pure VPU work).
            arg0 = wf0_b * xs_row                              # (8, L), small arguments
            s = jnp.sin(arg0)
            c = jnp.cos(arg0)
            darg = wdelta * xs_row                             # (1, L)
            ds = jnp.sin(darg)
            dc = jnp.cos(darg)
            basis_ref[0:8, :] = s
            basis_ref[F:F + 8, :] = c
            for g in range(1, n_groups):                       # static slices, fully unrolled
                s, c = s * dc + c * ds, c * dc - s * ds
                basis_ref[8 * g:8 * (g + 1), :] = s
                basis_ref[F + 8 * g:F + 8 * (g + 1), :] = c
        else:
            # Direct path (arbitrary frequency spacing): one (F, L) argument grid,
            # sin into the top half of the scratch, cos into the bottom half.
            arg = wf_b * xs_row                                # (F, L)
            basis_ref[0:F, :] = jnp.sin(arg)
            basis_ref[F:, :] = jnp.cos(arg)

        basis = basis_ref[...]                                 # (2F, L)

        # Single fused MXU contraction over L: (NC, L) x (2F, L)^T -> (NC, 2F).
        res = jax.lax.dot_general(
            ys_i.astype(compute_dtype), basis.astype(compute_dtype),
            (((1,), (1,)), ((), ())),
            preferred_element_type=jnp.float32)                # cols [0:F)=sin, [F:2F)=cos

        # Final layout in-kernel: (NC, 2F) -> (2NC, F); the column split is vreg-aligned (F=128k),
        # the sublane concat is tiny, and the store is a single lane-dense (2NC, F) write.
        out_i = jnp.concatenate([res[:, :F], res[:, F:]], axis=0)
        out_ref[i] = out_i.astype(out_ref.dtype)
        return carry

    jax.lax.fori_loop(0, tb, body, 0, unroll=True)


def embedding_layer_forward(x: jax.Array, embedding_space: jax.Array, time_scale: float, *,
                            batch_tile: int = 8,
                            compute_dtype=jnp.float32,          # jnp.bfloat16 on v6e/v7x if desired
                            use_recurrence=None) -> jax.Array:
    """Pallas implementation of EmbeddingLayer.forward (concrete sin/cos embed)."""
    B, C, L = x.shape
    NC = C - 1
    F = int(embedding_space.shape[0])
    w = 2.0 * math.pi * float(time_scale)

    # Decide whether the frequency grid is a uniform linspace -> angle-addition recurrence.
    wdelta = 0.0
    if use_recurrence is None or use_recurrence:
        use_recurrence = False
        if F >= 16 and F % 8 == 0:
            try:  # needs concrete frequency values; under tracing fall back to the direct path
                fnp = np.asarray(jax.device_get(embedding_space), dtype=np.float64)
                d = np.diff(fnp)
                if d.size and np.allclose(d, d.mean(), rtol=1e-4,
                                          atol=1e-6 * max(1.0, abs(float(d.mean())))):
                    use_recurrence = True
                    wdelta = float(w * 8.0 * float(fnp[-1] - fnp[0]) / (F - 1))
            except Exception:
                use_recurrence = False
    else:
        use_recurrence = False

    # Tiny shared operand: angular frequencies as a (F, 1) column.
    wf = (w * embedding_space.astype(jnp.float32)).reshape(F, 1)

    # Batch tiling: TB elements per grid step, but keep the grid >= 2 steps whenever B >= 2
    # so both v7x TensorCores get work.  Per-step VMEM (double-buffered x + out blocks plus the
    # (2F, L) basis scratch) stays far below the scoped default for sensible TB.
    tb = int(max(1, min(int(batch_tile), max(1, B // 2))))
    nb = pl.cdiv(B, tb)
    B_pad = nb * tb
    x_in = x if B_pad == B else jnp.pad(x, ((0, B_pad - B), (0, 0), (0, 0)))

    kernel = functools.partial(_embed_kernel, tb=tb, F=F, L=L,
                               use_recurrence=use_recurrence, wdelta=wdelta,
                               compute_dtype=compute_dtype)

    out = pl.pallas_call(
        kernel,
        out_shape=jax.ShapeDtypeStruct((B_pad, 2 * NC, F), jnp.float32),
        grid_spec=pltpu.PrefetchScalarGridSpec(
            num_scalar_prefetch=0,
            grid=(nb,),
            in_specs=[
                pl.BlockSpec((F, 1), lambda b: (0, 0)),          # wf  (shared)
                pl.BlockSpec((tb, C, L), lambda b: (b, 0, 0)),   # x   (per batch tile, un-sliced)
            ],
            out_specs=pl.BlockSpec((tb, 2 * NC, F), lambda b: (b, 0, 0)),
            scratch_shapes=[pltpu.VMEM((2 * F, L), jnp.float32)],
        ),
        compiler_params=pltpu.CompilerParams(
            dimension_semantics=("parallel",)),
    )(wf, x_in)

    return out[:B]                                               # already [B, 2*NC, F]


def _reference(x, embedding_space, time_scale):
    xs = x[:, 0, :].astype(jnp.float32)                       # (B, L)
    ys = x[:, 1:, :].astype(jnp.float32)                      # (B, NC, L)
    f = embedding_space.astype(jnp.float32)                   # (F,)
    arg = 2.0 * math.pi * time_scale * xs[:, :, None] * f[None, None, :]   # (B, L, F)
    sin_p = jnp.einsum("bcl,blf->bcf", ys, jnp.sin(arg))
    cos_p = jnp.einsum("bcl,blf->bcf", ys, jnp.cos(arg))
    return jnp.concatenate([sin_p, cos_p], axis=1)


if __name__ == "__main__":
    # small, module-consistent shapes
    B = 2             # cfg.batch_size
    C = 4             # 1 time channel + 3 value channels
    L = 128           # cfg.series_length
    F = 128           # nfreq = embedding_space.shape[0]
    TIME_SCALE = 1.0  # cfg.time_scale

    key = jax.random.PRNGKey(0)
    k_t, k_y = jax.random.split(key)

    # deterministic example inputs: sorted times in channel 0, random values elsewhere
    times = jnp.sort(jax.random.uniform(k_t, (B, 1, L), dtype=jnp.float32) * 5.0, axis=-1)
    values = jax.random.normal(k_y, (B, C - 1, L), dtype=jnp.float32)
    x = jnp.concatenate([times, values], axis=1)              # (B, C, L)

    # deterministic embedding space (uniform frequency grid -> recurrence fast path)
    embedding_space = jnp.linspace(0.1, 4.0, F, dtype=jnp.float32)

    ref = _reference(x, embedding_space, TIME_SCALE)

    # Fast path: uniform frequency grid detected -> angle-addition recurrence.
    out = jax.block_until_ready(embedding_layer_forward(x, embedding_space, TIME_SCALE))
    assert out.shape == (B, 2 * (C - 1), F), out.shape
    assert jnp.allclose(out, ref, atol=3e-3, rtol=3e-3), "recurrence path mismatch vs reference"

    # Generic path (arbitrary frequency spacing): direct sin/cos basis.
    out2 = jax.block_until_ready(
        embedding_layer_forward(x, embedding_space, TIME_SCALE, use_recurrence=False))
    assert jnp.allclose(out2, ref, atol=3e-3, rtol=3e-3), "direct path mismatch vs reference"

    print("KERNEL_OK")
</pallas_src>

<mosaic_0001>
module attributes {stable_mosaic.version = 11 : i64} {
  func.func @_embed_kernel(%arg0: i32, %arg1: memref<128x1xf32, #tpu.memory_space<vmem>>, %arg2: memref<1x4x128xf32, #tpu.memory_space<vmem>>, %arg3: memref<1x6x128xf32, #tpu.memory_space<vmem>>, %arg4: memref<256x128xf32, #tpu.memory_space<vmem>>) attributes {dimension_semantics = [#tpu.dimension_semantics<parallel>], iteration_bounds = array<i64: 2>, scalar_prefetch = 0 : i64, scratch_operands = 1 : i64, tpu.core_type = #tpu.core_type<tc>, window_params = [{pipeline_mode = #tpu.pipeline_mode<synchronous>, transform_indices = @transform_0, window_bounds = array<i64: 128, 1>}, {transform_indices = @transform_1, window_bounds = array<i64: 1, 4, 128>}, {transform_indices = @transform_2, window_bounds = array<i64: 1, 6, 128>}]} {
    %c0 = arith.constant 0 : index
    %c0_0 = arith.constant 0 : index
    %0 = vector.load %arg1[%c0, %c0_0] : memref<128x1xf32, #tpu.memory_space<vmem>>, vector<8x1xf32>
    %1 = vector.shape_cast %0 : vector<8x1xf32> to vector<8x1xf32>
    %2 = vector.broadcast %1 : vector<8x1xf32> to vector<8x128xf32>
    %c0_i32 = arith.constant 0 : i32
    %3 = arith.index_cast %c0_i32 : i32 to index
    %c0_1 = arith.constant 0 : index
    %c0_2 = arith.constant 0 : index
    %4 = vector.load %arg2[%3, %c0_1, %c0_2] : memref<1x4x128xf32, #tpu.memory_space<vmem>>, vector<1x4x128xf32>
    %5 = vector.shape_cast %4 : vector<1x4x128xf32> to vector<4x128xf32>
    %6 = vector.extract_strided_slice %5 {offsets = [0, 0], sizes = [1, 128], strides = [1, 1]} : vector<4x128xf32> to vector<1x128xf32>
    %7 = vector.extract_strided_slice %5 {offsets = [1, 0], sizes = [3, 128], strides = [1, 1]} : vector<4x128xf32> to vector<3x128xf32>
    %8 = vector.broadcast %6 : vector<1x128xf32> to vector<8x128xf32>
    %9 = arith.mulf %2, %8 : vector<8x128xf32>
    %10 = math.sin %9 : vector<8x128xf32>
    %11 = math.cos %9 : vector<8x128xf32>
    %cst = arith.constant 1.54358566 : f32
    %12 = vector.broadcast %cst : f32 to vector<1x128xf32>
    %13 = arith.mulf %12, %6 : vector<1x128xf32>
    %14 = math.sin %13 : vector<1x128xf32>
    %15 = math.cos %13 : vector<1x128xf32>
    %c0_3 = arith.constant 0 : index
    %c0_4 = arith.constant 0 : index
    %16 = vector.load %arg4[%c0_3, %c0_4] : memref<256x128xf32, #tpu.memory_space<vmem>>, vector<8x128xf32>
    tpu.vector_store %arg4[%c0_3, %c0_4], %10 {strides = array<i32>} : memref<256x128xf32, #tpu.memory_space<vmem>>, vector<8x128xf32>,
    %c128 = arith.constant 128 : index
    %c0_5 = arith.constant 0 : index
    %17 = vector.load %arg4[%c128, %c0_5] : memref<256x128xf32, #tpu.memory_space<vmem>>, vector<8x128xf32>
    tpu.vector_store %arg4[%c128, %c0_5], %11 {strides = array<i32>} : memref<256x128xf32, #tpu.memory_space<vmem>>, vector<8x128xf32>,
    %18 = vector.broadcast %15 : vector<1x128xf32> to vector<8x128xf32>
    %19 = arith.mulf %10, %18 : vector<8x128xf32>
    %20 = vector.broadcast %14 : vector<1x128xf32> to vector<8x128xf32>
    %21 = arith.mulf %11, %20 : vector<8x128xf32>
    %22 = arith.addf %19, %21 : vector<8x128xf32>
    %23 = vector.broadcast %15 : vector<1x128xf32> to vector<8x128xf32>
    %24 = arith.mulf %11, %23 : vector<8x128xf32>
    %25 = vector.broadcast %14 : vector<1x128xf32> to vector<8x128xf32>
    %26 = arith.mulf %10, %25 : vector<8x128xf32>
    %27 = arith.subf %24, %26 : vector<8x128xf32>
    %c8 = arith.constant 8 : index
    %c0_6 = arith.constant 0 : index
    %28 = vector.load %arg4[%c8, %c0_6] : memref<256x128xf32, #tpu.memory_space<vmem>>, vector<8x128xf32>
    tpu.vector_store %arg4[%c8, %c0_6], %22 {strides = array<i32>} : memref<256x128xf32, #tpu.memory_space<vmem>>, vector<8x128xf32>,
    %c136 = arith.constant 136 : index
    %c0_7 = arith.constant 0 : index
    %29 = vector.load %arg4[%c136, %c0_7] : memref<256x128xf32, #tpu.memory_space<vmem>>, vector<8x128xf32>
    tpu.vector_store %arg4[%c136, %c0_7], %27 {strides = array<i32>} : memref<256x128xf32, #tpu.memory_space<vmem>>, vector<8x128xf32>,
    %30 = vector.broadcast %15 : vector<1x128xf32> to vector<8x128xf32>
    %31 = arith.mulf %22, %30 : vector<8x128xf32>
    %32 = vector.broadcast %14 : vector<1x128xf32> to vector<8x128xf32>
    %33 = arith.mulf %27, %32 : vector<8x128xf32>
    %34 = arith.addf %31, %33 : vector<8x128xf32>
    %35 = vector.broadcast %15 : vector<1x128xf32> to vector<8x128xf32>
    %36 = arith.mulf %27, %35 : vector<8x128xf32>
    %37 = vector.broadcast %14 : vector<1x128xf32> to vector<8x128xf32>
    %38 = arith.mulf %22, %37 : vector<8x128xf32>
    %39 = arith.subf %36, %38 : vector<8x128xf32>
    %c16 = arith.constant 16 : index
    %c0_8 = arith.constant 0 : index
    %40 = vector.load %arg4[%c16, %c0_8] : memref<256x128xf32, #tpu.memory_space<vmem>>, vector<8x128xf32>
    tpu.vector_store %arg4[%c16, %c0_8], %34 {strides = array<i32>} : memref<256x128xf32, #tpu.memory_space<vmem>>, vector<8x128xf32>,
    %c144 = arith.constant 144 : index
    %c0_9 = arith.constant 0 : index
    %41 = vector.load %arg4[%c144, %c0_9] : memref<256x128xf32, #tpu.memory_space<vmem>>, vector<8x128xf32>
    tpu.vector_store %arg4[%c144, %c0_9], %39 {strides = array<i32>} : memref<256x128xf32, #tpu.memory_space<vmem>>, vector<8x128xf32>,
    %42 = vector.broadcast %15 : vector<1x128xf32> to vector<8x128xf32>
    %43 = arith.mulf %34, %42 : vector<8x128xf32>
    %44 = vector.broadcast %14 : vector<1x128xf32> to vector<8x128xf32>
    %45 = arith.mulf %39, %44 : vector<8x128xf32>
    %46 = arith.addf %43, %45 : vector<8x128xf32>
    %47 = vector.broadcast %15 : vector<1x128xf32> to vector<8x128xf32>
    %48 = arith.mulf %39, %47 : vector<8x128xf32>
    %49 = vector.broadcast %14 : vector<1x128xf32> to vector<8x128xf32>
    %50 = arith.mulf %34, %49 : vector<8x128xf32>
    %51 = arith.subf %48, %50 : vector<8x128xf32>
    %c24 = arith.constant 24 : index
    %c0_10 = arith.constant 0 : index
    %52 = vector.load %arg4[%c24, %c0_10] : memref<256x128xf32, #tpu.memory_space<vmem>>, vector<8x128xf32>
    tpu.vector_store %arg4[%c24, %c0_10], %46 {strides = array<i32>} : memref<256x128xf32, #tpu.memory_space<vmem>>, vector<8x128xf32>,
    %c152 = arith.constant 152 : index
    %c0_11 = arith.constant 0 : index
    %53 = vector.load %arg4[%c152, %c0_11] : memref<256x128xf32, #tpu.memory_space<vmem>>, vector<8x128xf32>
    tpu.vector_store %arg4[%c152, %c0_11], %51 {strides = array<i32>} : memref<256x128xf32, #tpu.memory_space<vmem>>, vector<8x128xf32>,
    %54 = vector.broadcast %15 : vector<1x128xf32> to vector<8x128xf32>
    %55 = arith.mulf %46, %54 : vector<8x128xf32>
    %56 = vector.broadcast %14 : vector<1x128xf32> to vector<8x128xf32>
    %57 = arith.mulf %51, %56 : vector<8x128xf32>
    %58 = arith.addf %55, %57 : vector<8x128xf32>
    %59 = vector.broadcast %15 : vector<1x128xf32> to vector<8x128xf32>
    %60 = arith.mulf %51, %59 : vector<8x128xf32>
    %61 = vector.broadcast %14 : vector<1x128xf32> to vector<8x128xf32>
    %62 = arith.mulf %46, %61 : vector<8x128xf32>
    %63 = arith.subf %60, %62 : vector<8x128xf32>
    %c32 = arith.constant 32 : index
    %c0_12 = arith.constant 0 : index
    %64 = vector.load %arg4[%c32, %c0_12] : memref<256x128xf32, #tpu.memory_space<vmem>>, vector<8x128xf32>
    tpu.vector_store %arg4[%c32, %c0_12], %58 {strides = array<i32>} : memref<256x128xf32, #tpu.memory_space<vmem>>, vector<8x128xf32>,
    %c160 = arith.constant 160 : index
    %c0_13 = arith.constant 0 : index
    %65 = vector.load %arg4[%c160, %c0_13] : memref<256x128xf32, #tpu.memory_space<vmem>>, vector<8x128xf32>
    tpu.vector_store %arg4[%c160, %c0_13], %63 {strides = array<i32>} : memref<256x128xf32, #tpu.memory_space<vmem>>, vector<8x128xf32>,
    %66 = vector.broadcast %15 : vector<1x128xf32> to vector<8x128xf32>
    %67 = arith.mulf %58, %66 : vector<8x128xf32>
    %68 = vector.broadcast %14 : vector<1x128xf32> to vector<8x128xf32>
    %69 = arith.mulf %63, %68 : vector<8x128xf32>
    %70 = arith.addf %67, %69 : vector<8x128xf32>
    %71 = vector.broadcast %15 : vector<1x128xf32> to vector<8x128xf32>
    %72 = arith.mulf %63, %71 : vector<8x128xf32>
    %73 = vector.broadcast %14 : vector<1x128xf32> to vector<8x128xf32>
    %74 = arith.mulf %58, %73 : vector<8x128xf32>
    %75 = arith.subf %72, %74 : vector<8x128xf32>
    %c40 = arith.constant 40 : index
    %c0_14 = arith.constant 0 : index
    %76 = vector.load %arg4[%c40, %c0_14] : memref<256x128xf32, #tpu.memory_space<vmem>>, vector<8x128xf32>
    tpu.vector_store %arg4[%c40, %c0_14], %70 {strides = array<i32>} : memref<256x128xf32, #tpu.memory_space<vmem>>, vector<8x128xf32>,
    %c168 = arith.constant 168 : index
    %c0_15 = arith.constant 0 : index
    %77 = vector.load %arg4[%c168, %c0_15] : memref<256x128xf32, #tpu.memory_space<vmem>>, vector<8x128xf32>
    tpu.vector_store %arg4[%c168, %c0_15], %75 {strides = array<i32>} : memref<256x128xf32, #tpu.memory_space<vmem>>, vector<8x128xf32>,
    %78 = vector.broadcast %15 : vector<1x128xf32> to vector<8x128xf32>
    %79 = arith.mulf %70, %78 : vector<8x128xf32>
    %80 = vector.broadcast %14 : vector<1x128xf32> to vector<8x128xf32>
    %81 = arith.mulf %75, %80 : vector<8x128xf32>
    %82 = arith.addf %79, %81 : vector<8x128xf32>
    %83 = vector.broadcast %15 : vector<1x128xf32> to vector<8x128xf32>
    %84 = arith.mulf %75, %83 : vector<8x128xf32>
    %85 = vector.broadcast %14 : vector<1x128xf32> to vector<8x128xf32>
    %86 = arith.mulf %70, %85 : vector<8x128xf32>
    %87 = arith.subf %84, %86 : vector<8x128xf32>
    %c48 = arith.constant 48 : index
    %c0_16 = arith.constant 0 : index
    %88 = vector.load %arg4[%c48, %c0_16] : memref<256x128xf32, #tpu.memory_space<vmem>>, vector<8x128xf32>
    tpu.vector_store %arg4[%c48, %c0_16], %82 {strides = array<i32>} : memref<256x128xf32, #tpu.memory_space<vmem>>, vector<8x128xf32>,
    %c176 = arith.constant 176 : index
    %c0_17 = arith.constant 0 : index
    %89 = vector.load %arg4[%c176, %c0_17] : memref<256x128xf32, #tpu.memory_space<vmem>>, vector<8x128xf32>
    tpu.vector_store %arg4[%c176, %c0_17], %87 {strides = array<i32>} : memref<256x128xf32, #tpu.memory_space<vmem>>, vector<8x128xf32>,
    %90 = vector.broadcast %15 : vector<1x128xf32> to vector<8x128xf32>
    %91 = arith.mulf %82, %90 : vector<8x128xf32>
    %92 = vector.broadcast %14 : vector<1x128xf32> to vector<8x128xf32>
    %93 = arith.mulf %87, %92 : vector<8x128xf32>
    %94 = arith.addf %91, %93 : vector<8x128xf32>
    %95 = vector.broadcast %15 : vector<1x128xf32> to vector<8x128xf32>
    %96 = arith.mulf %87, %95 : vector<8x128xf32>
    %97 = vector.broadcast %14 : vector<1x128xf32> to vector<8x128xf32>
    %98 = arith.mulf %82, %97 : vector<8x128xf32>
    %99 = arith.subf %96, %98 : vector<8x128xf32>
    %c56 = arith.constant 56 : index
    %c0_18 = arith.constant 0 : index
    %100 = vector.load %arg4[%c56, %c0_18] : memref<256x128xf32, #tpu.memory_space<vmem>>, vector<8x128xf32>
    tpu.vector_store %arg4[%c56, %c0_18], %94 {strides = array<i32>} : memref<256x128xf32, #tpu.memory_space<vmem>>, vector<8x128xf32>,
    %c184 = arith.constant 184 : index
    %c0_19 = arith.constant 0 : index
    %101 = vector.load %arg4[%c184, %c0_19] : memref<256x128xf32, #tpu.memory_space<vmem>>, vector<8x128xf32>
    tpu.vector_store %arg4[%c184, %c0_19], %99 {strides = array<i32>} : memref<256x128xf32, #tpu.memory_space<vmem>>, vector<8x128xf32>,
    %102 = vector.broadcast %15 : vector<1x128xf32> to vector<8x128xf32>
    %103 = arith.mulf %94, %102 : vector<8x128xf32>
    %104 = vector.broadcast %14 : vector<1x128xf32> to vector<8x128xf32>
    %105 = arith.mulf %99, %104 : vector<8x128xf32>
    %106 = arith.addf %103, %105 : vector<8x128xf32>
    %107 = vector.broadcast %15 : vector<1x128xf32> to vector<8x128xf32>
    %108 = arith.mulf %99, %107 : vector<8x128xf32>
    %109 = vector.broadcast %14 : vector<1x128xf32> to vector<8x128xf32>
    %110 = arith.mulf %94, %109 : vector<8x128xf32>
    %111 = arith.subf %108, %110 : vector<8x128xf32>
    %c64 = arith.constant 64 : index
    %c0_20 = arith.constant 0 : index
    %112 = vector.load %arg4[%c64, %c0_20] : memref<256x128xf32, #tpu.memory_space<vmem>>, vector<8x128xf32>
    tpu.vector_store %arg4[%c64, %c0_20], %106 {strides = array<i32>} : memref<256x128xf32, #tpu.memory_space<vmem>>, vector<8x128xf32>,
    %c192 = arith.constant 192 : index
    %c0_21 = arith.constant 0 : index
    %113 = vector.load %arg4[%c192, %c0_21] : memref<256x128xf32, #tpu.memory_space<vmem>>, vector<8x128xf32>
    tpu.vector_store %arg4[%c192, %c0_21], %111 {strides = array<i32>} : memref<256x128xf32, #tpu.memory_space<vmem>>, vector<8x128xf32>,
    %114 = vector.broadcast %15 : vector<1x128xf32> to vector<8x128xf32>
    %115 = arith.mulf %106, %114 : vector<8x128xf32>
    %116 = vector.broadcast %14 : vector<1x128xf32> to vector<8x128xf32>
    %117 = arith.mulf %111, %116 : vector<8x128xf32>
    %118 = arith.addf %115, %117 : vector<8x128xf32>
    %119 = vector.broadcast %15 : vector<1x128xf32> to vector<8x128xf32>
    %120 = arith.mulf %111, %119 : vector<8x128xf32>
    %121 = vector.broadcast %14 : vector<1x128xf32> to vector<8x128xf32>
    %122 = arith.mulf %106, %121 : vector<8x128xf32>
    %123 = arith.subf %120, %122 : vector<8x128xf32>
    %c72 = arith.constant 72 : index
    %c0_22 = arith.constant 0 : index
    %124 = vector.load %arg4[%c72, %c0_22] : memref<256x128xf32, #tpu.memory_space<vmem>>, vector<8x128xf32>
    tpu.vector_store %arg4[%c72, %c0_22], %118 {strides = array<i32>} : memref<256x128xf32, #tpu.memory_space<vmem>>, vector<8x128xf32>,
    %c200 = arith.constant 200 : index
    %c0_23 = arith.constant 0 : index
    %125 = vector.load %arg4[%c200, %c0_23] : memref<256x128xf32, #tpu.memory_space<vmem>>, vector<8x128xf32>
    tpu.vector_store %arg4[%c200, %c0_23], %123 {strides = array<i32>} : memref<256x128xf32, #tpu.memory_space<vmem>>, vector<8x128xf32>,
    %126 = vector.broadcast %15 : vector<1x128xf32> to vector<8x128xf32>
    %127 = arith.mulf %118, %126 : vector<8x128xf32>
    %128 = vector.broadcast %14 : vector<1x128xf32> to vector<8x128xf32>
    %129 = arith.mulf %123, %128 : vector<8x128xf32>
    %130 = arith.addf %127, %129 : vector<8x128xf32>
    %131 = vector.broadcast %15 : vector<1x128xf32> to vector<8x128xf32>
    %132 = arith.mulf %123, %131 : vector<8x128xf32>
    %133 = vector.broadcast %14 : vector<1x128xf32> to vector<8x128xf32>
    %134 = arith.mulf %118, %133 : vector<8x128xf32>
    %135 = arith.subf %132, %134 : vector<8x128xf32>
    %c80 = arith.constant 80 : index
    %c0_24 = arith.constant 0 : index
    %136 = vector.load %arg4[%c80, %c0_24] : memref<256x128xf32, #tpu.memory_space<vmem>>, vector<8x128xf32>
    tpu.vector_store %arg4[%c80, %c0_24], %130 {strides = array<i32>} : memref<256x128xf32, #tpu.memory_space<vmem>>, vector<8x128xf32>,
    %c208 = arith.constant 208 : index
    %c0_25 = arith.constant 0 : index
    %137 = vector.load %arg4[%c208, %c0_25] : memref<256x128xf32, #tpu.memory_space<vmem>>, vector<8x128xf32>
    tpu.vector_store %arg4[%c208, %c0_25], %135 {strides = array<i32>} : memref<256x128xf32, #tpu.memory_space<vmem>>, vector<8x128xf32>,
    %138 = vector.broadcast %15 : vector<1x128xf32> to vector<8x128xf32>
    %139 = arith.mulf %130, %138 : vector<8x128xf32>
    %140 = vector.broadcast %14 : vector<1x128xf32> to vector<8x128xf32>
    %141 = arith.mulf %135, %140 : vector<8x128xf32>
    %142 = arith.addf %139, %141 : vector<8x128xf32>
    %143 = vector.broadcast %15 : vector<1x128xf32> to vector<8x128xf32>
    %144 = arith.mulf %135, %143 : vector<8x128xf32>
    %145 = vector.broadcast %14 : vector<1x128xf32> to vector<8x128xf32>
    %146 = arith.mulf %130, %145 : vector<8x128xf32>
    %147 = arith.subf %144, %146 : vector<8x128xf32>
    %c88 = arith.constant 88 : index
    %c0_26 = arith.constant 0 : index
    %148 = vector.load %arg4[%c88, %c0_26] : memref<256x128xf32, #tpu.memory_space<vmem>>, vector<8x128xf32>
    tpu.vector_store %arg4[%c88, %c0_26], %142 {strides = array<i32>} : memref<256x128xf32, #tpu.memory_space<vmem>>, vector<8x128xf32>,
    %c216 = arith.constant 216 : index
    %c0_27 = arith.constant 0 : index
    %149 = vector.load %arg4[%c216, %c0_27] : memref<256x128xf32, #tpu.memory_space<vmem>>, vector<8x128xf32>
    tpu.vector_store %arg4[%c216, %c0_27], %147 {strides = array<i32>} : memref<256x128xf32, #tpu.memory_space<vmem>>, vector<8x128xf32>,
    %150 = vector.broadcast %15 : vector<1x128xf32> to vector<8x128xf32>
    %151 = arith.mulf %142, %150 : vector<8x128xf32>
    %152 = vector.broadcast %14 : vector<1x128xf32> to vector<8x128xf32>
    %153 = arith.mulf %147, %152 : vector<8x128xf32>
    %154 = arith.addf %151, %153 : vector<8x128xf32>
    %155 = vector.broadcast %15 : vector<1x128xf32> to vector<8x128xf32>
    %156 = arith.mulf %147, %155 : vector<8x128xf32>
    %157 = vector.broadcast %14 : vector<1x128xf32> to vector<8x128xf32>
    %158 = arith.mulf %142, %157 : vector<8x128xf32>
    %159 = arith.subf %156, %158 : vector<8x128xf32>
    %c96 = arith.constant 96 : index
    %c0_28 = arith.constant 0 : index
    %160 = vector.load %arg4[%c96, %c0_28] : memref<256x128xf32, #tpu.memory_space<vmem>>, vector<8x128xf32>
    tpu.vector_store %arg4[%c96, %c0_28], %154 {strides = array<i32>} : memref<256x128xf32, #tpu.memory_space<vmem>>, vector<8x128xf32>,
    %c224 = arith.constant 224 : index
    %c0_29 = arith.constant 0 : index
    %161 = vector.load %arg4[%c224, %c0_29] : memref<256x128xf32, #tpu.memory_space<vmem>>, vector<8x128xf32>
    tpu.vector_store %arg4[%c224, %c0_29], %159 {strides = array<i32>} : memref<256x128xf32, #tpu.memory_space<vmem>>, vector<8x128xf32>,
    %162 = vector.broadcast %15 : vector<1x128xf32> to vector<8x128xf32>
    %163 = arith.mulf %154, %162 : vector<8x128xf32>
    %164 = vector.broadcast %14 : vector<1x128xf32> to vector<8x128xf32>
    %165 = arith.mulf %159, %164 : vector<8x128xf32>
    %166 = arith.addf %163, %165 : vector<8x128xf32>
    %167 = vector.broadcast %15 : vector<1x128xf32> to vector<8x128xf32>
    %168 = arith.mulf %159, %167 : vector<8x128xf32>
    %169 = vector.broadcast %14 : vector<1x128xf32> to vector<8x128xf32>
    %170 = arith.mulf %154, %169 : vector<8x128xf32>
    %171 = arith.subf %168, %170 : vector<8x128xf32>
    %c104 = arith.constant 104 : index
    %c0_30 = arith.constant 0 : index
    %172 = vector.load %arg4[%c104, %c0_30] : memref<256x128xf32, #tpu.memory_space<vmem>>, vector<8x128xf32>
    tpu.vector_store %arg4[%c104, %c0_30], %166 {strides = array<i32>} : memref<256x128xf32, #tpu.memory_space<vmem>>, vector<8x128xf32>,
    %c232 = arith.constant 232 : index
    %c0_31 = arith.constant 0 : index
    %173 = vector.load %arg4[%c232, %c0_31] : memref<256x128xf32, #tpu.memory_space<vmem>>, vector<8x128xf32>
    tpu.vector_store %arg4[%c232, %c0_31], %171 {strides = array<i32>} : memref<256x128xf32, #tpu.memory_space<vmem>>, vector<8x128xf32>,
    %174 = vector.broadcast %15 : vector<1x128xf32> to vector<8x128xf32>
    %175 = arith.mulf %166, %174 : vector<8x128xf32>
    %176 = vector.broadcast %14 : vector<1x128xf32> to vector<8x128xf32>
    %177 = arith.mulf %171, %176 : vector<8x128xf32>
    %178 = arith.addf %175, %177 : vector<8x128xf32>
    %179 = vector.broadcast %15 : vector<1x128xf32> to vector<8x128xf32>
    %180 = arith.mulf %171, %179 : vector<8x128xf32>
    %181 = vector.broadcast %14 : vector<1x128xf32> to vector<8x128xf32>
    %182 = arith.mulf %166, %181 : vector<8x128xf32>
    %183 = arith.subf %180, %182 : vector<8x128xf32>
    %c112 = arith.constant 112 : index
    %c0_32 = arith.constant 0 : index
    %184 = vector.load %arg4[%c112, %c0_32] : memref<256x128xf32, #tpu.memory_space<vmem>>, vector<8x128xf32>
    tpu.vector_store %arg4[%c112, %c0_32], %178 {strides = array<i32>} : memref<256x128xf32, #tpu.memory_space<vmem>>, vector<8x128xf32>,
    %c240 = arith.constant 240 : index
    %c0_33 = arith.constant 0 : index
    %185 = vector.load %arg4[%c240, %c0_33] : memref<256x128xf32, #tpu.memory_space<vmem>>, vector<8x128xf32>
    tpu.vector_store %arg4[%c240, %c0_33], %183 {strides = array<i32>} : memref<256x128xf32, #tpu.memory_space<vmem>>, vector<8x128xf32>,
    %186 = vector.broadcast %15 : vector<1x128xf32> to vector<8x128xf32>
    %187 = arith.mulf %178, %186 : vector<8x128xf32>
    %188 = vector.broadcast %14 : vector<1x128xf32> to vector<8x128xf32>
    %189 = arith.mulf %183, %188 : vector<8x128xf32>
    %190 = arith.addf %187, %189 : vector<8x128xf32>
    %191 = vector.broadcast %15 : vector<1x128xf32> to vector<8x128xf32>
    %192 = arith.mulf %183, %191 : vector<8x128xf32>
    %193 = vector.broadcast %14 : vector<1x128xf32> to vector<8x128xf32>
    %194 = arith.mulf %178, %193 : vector<8x128xf32>
    %195 = arith.subf %192, %194 : vector<8x128xf32>
    %c120 = arith.constant 120 : index
    %c0_34 = arith.constant 0 : index
    %196 = vector.load %arg4[%c120, %c0_34] : memref<256x128xf32, #tpu.memory_space<vmem>>, vector<8x128xf32>
    tpu.vector_store %arg4[%c120, %c0_34], %190 {strides = array<i32>} : memref<256x128xf32, #tpu.memory_space<vmem>>, vector<8x128xf32>,
    %c248 = arith.constant 248 : index
    %c0_35 = arith.constant 0 : index
    %197 = vector.load %arg4[%c248, %c0_35] : memref<256x128xf32, #tpu.memory_space<vmem>>, vector<8x128xf32>
    tpu.vector_store %arg4[%c248, %c0_35], %195 {strides = array<i32>} : memref<256x128xf32, #tpu.memory_space<vmem>>, vector<8x128xf32>,
    %c0_36 = arith.constant 0 : index
    %c0_37 = arith.constant 0 : index
    %198 = vector.load %arg4[%c0_36, %c0_37] : memref<256x128xf32, #tpu.memory_space<vmem>>, vector<256x128xf32>
    %cst_38 = arith.constant dense<0.000000e+00> : vector<3x256xf32>
    %199 = tpu.matmul %7, %198, %cst_38 {dimension_numbers = #tpu.dot_dimension_numbers<[1], [1], [0], [0], [0, 0, 1, 0], [], []>} : vector<3x128xf32>, vector<256x128xf32>, vector<3x256xf32> -> vector<3x256xf32>
    %200 = vector.extract_strided_slice %199 {offsets = [0, 0], sizes = [3, 128], strides = [1, 1]} : vector<3x256xf32> to vector<3x128xf32>
    %201 = vector.extract_strided_slice %199 {offsets = [0, 128], sizes = [3, 128], strides = [1, 1]} : vector<3x256xf32> to vector<3x128xf32>
    %202 = tpu.concatenate %200, %201 in 0 : vector<3x128xf32>, vector<3x128xf32> -> vector<6x128xf32>
    %203 = arith.index_cast %c0_i32 : i32 to index
    %c0_39 = arith.constant 0 : index
    %c0_40 = arith.constant 0 : index
    %204 = vector.load %arg3[%203, %c0_39, %c0_40] : memref<1x6x128xf32, #tpu.memory_space<vmem>>, vector<1x6x128xf32>
    %205 = vector.shape_cast %204 : vector<1x6x128xf32> to vector<6x128xf32>
    %206 = vector.shape_cast %202 : vector<6x128xf32> to vector<1x6x128xf32>
    tpu.vector_store %arg3[%203, %c0_39, %c0_40], %206 {strides = array<i32>} : memref<1x6x128xf32, #tpu.memory_space<vmem>>, vector<1x6x128xf32>,
    %c1_i32 = arith.constant 1 : i32
    return
  }
  func.func @transform_0(%arg0: i32) -> (i32, i32) {
    %c0_i32 = arith.constant 0 : i32
    %c0_i32_0 = arith.constant 0 : i32
    %c0_i32_1 = arith.constant 0 : i32
    return %c0_i32, %c0_i32_0 : i32, i32
  }
  func.func @transform_1(%arg0: i32) -> (i32, i32, i32) {
    %c0_i32 = arith.constant 0 : i32
    %c0_i32_0 = arith.constant 0 : i32
    %c0_i32_1 = arith.constant 0 : i32
    return %arg0, %c0_i32, %c0_i32_0 : i32, i32, i32
  }
  func.func @transform_2(%arg0: i32) -> (i32, i32, i32) {
    %c0_i32 = arith.constant 0 : i32
    %c0_i32_0 = arith.constant 0 : i32
    %c0_i32_1 = arith.constant 0 : i32
    return %arg0, %c0_i32, %c0_i32_0 : i32, i32, i32
  }
}

</mosaic_0001>

<llo_original>
// kernel: tpu_custom_call.1
$region0: #{tpu_custom_call.1}
  #allocation0 [shape = 'u32[]', space=smem, size = 0x4, offset = 0x4, fixed_abs, tag = 'smem constant byte address 0x4 - core index']
  #allocation1 [shape = 'u32[72,128]{1,0:T(1,128)}', space=vmem, size = 0x9000, scoped, tag = 'internal scratch']
  #allocation2 [shape = 'f32[256,128]{1,0:T(8,128)}', space=vmem, size = 0x20000, scoped, tag = 'scratch operand']
  %s0 = inlined_call_operand.vmem [shape: f32[128,1], index: 0, kind: input, shape index: {}]
  %s1 = inlined_call_operand.vmem [shape: f32[2,4,128], index: 1, kind: input, shape index: {}]
  %s2 = inlined_call_operand.vmem [shape: f32[2,6,128], index: 2, kind: output, shape index: {}]
  %s3 = sld [smem:[#allocation0]]
  $region41: #{tpu_custom_call.1} parent=0
    _
  %s5 = ssub.s32 1, %s3
  %s6 = scalar_select 0, %s5, %s3
  loop: start=0, step=1, limit=4
  $region2: #{tpu_custom_call.1} parent=0 // loop_pre_header
    _
  $region3: #{tpu_custom_call.1} parent=0 // loop_header
    %s8 = sphi 0, %s12
    %p9 = scmp.ge.s32.totalorder %s8, 4
    %s16 = sphi 0, %s16
    %s18 = sphi 0, %s16
    %s19 = sphi 0, %s18
    %s33 = sphi 0, %s19
    %s39 = sphi 0, %s41
    %s42 = sphi 0, %s39
    %s43 = sphi 0, %s42
    %s59 = sphi 0, %s43
    %s65 = sphi 0, %s67
    %s68 = sphi 0, %s65
    %s69 = sphi 0, %s68
    %s85 = sphi 0, %s69
  $region4: #{tpu_custom_call.1} parent=0 // loop_header_branch
    %11 = sbr.rel (%p9) target = $region8
  $region5: #{tpu_custom_call.1} parent=0 // loop_body
    %s13 = ssub.s32 %s8, 1
    %s14 = ssub.s32 %s8, 2
    %s15 = sadd.s32 %s8, 1
    %s17 = sadd.s32 %s16, 1
    %p20 = scmp.eq.s32.totalorder %s8, 1
    %p21 = scmp.ne.s32.totalorder %s16, %s18
    %p22 = scmp.eq.s32.totalorder %s8, 0
    %p23 = por %p21, %p22
    %p24 = scmp.ne.s32.totalorder %s16, %s18
    %p25 = scmp.eq.s32.totalorder %s13, 1
    %p26 = por %p24, %p25
    %p27 = scmp.ne.s32.totalorder %s18, %s19
    %p28 = scmp.eq.s32.totalorder %s13, 0
    %p29 = por %p27, %p28
    %p30 = scmp.ne.s32.totalorder %s18, %s19
    %p31 = scmp.eq.s32.totalorder %s14, 1
    %p32 = por %p30, %p31
    %p34 = scmp.ne.s32.totalorder %s19, %s33
    %p35 = scmp.eq.s32.totalorder %s14, 0
    %p36 = por %p34, %p35
    %s37 = ssub.s32 %s8, %s15
    %p38 = scmp.eq.s32.totalorder %s37, 0
    %s40 = sadd.s32 %s39, 1
    %s41 = scalar_select %p38, %s39, %s40
    %p44 = pneg %p38
    %p45 = scmp.eq.s32.totalorder %s8, 1
    %p46 = por %p44, %p45
    %p47 = scmp.ne.s32.totalorder %s39, %s42
    %p48 = scmp.eq.s32.totalorder %s8, 0
    %p49 = por %p47, %p48
    %p50 = scmp.ne.s32.totalorder %s39, %s42
    %p51 = scmp.eq.s32.totalorder %s13, 1
    %p52 = por %p50, %p51
    %p53 = scmp.ne.s32.totalorder %s42, %s43
    %p54 = scmp.eq.s32.totalorder %s13, 0
    %p55 = por %p53, %p54
    %p56 = scmp.ne.s32.totalorder %s42, %s43
    %p57 = scmp.eq.s32.totalorder %s14, 1
    %p58 = por %p56, %p57
    %p60 = scmp.ne.s32.totalorder %s43, %s59
    %p61 = scmp.eq.s32.totalorder %s14, 0
    %p62 = por %p60, %p61
    %s63 = ssub.s32 %s8, %s15
    %p64 = scmp.eq.s32.totalorder %s63, 0
    %s66 = sadd.s32 %s65, 1
    %s67 = scalar_select %p64, %s65, %s66
    %p70 = pneg %p64
    %p71 = scmp.eq.s32.totalorder %s8, 1
    %p72 = por %p70, %p71
    %p73 = scmp.ne.s32.totalorder %s65, %s68
    %p74 = scmp.eq.s32.totalorder %s8, 0
    %p75 = por %p73, %p74
    %p76 = scmp.ne.s32.totalorder %s65, %s68
    %p77 = scmp.eq.s32.totalorder %s13, 1
    %p78 = por %p76, %p77
    %p79 = scmp.ne.s32.totalorder %s68, %s69
    %p80 = scmp.eq.s32.totalorder %s13, 0
    %p81 = por %p79, %p80
    %p82 = scmp.ne.s32.totalorder %s68, %s69
    %p83 = scmp.eq.s32.totalorder %s14, 1
    %p84 = por %p82, %p83
    %p86 = scmp.ne.s32.totalorder %s69, %s85
    %p87 = scmp.eq.s32.totalorder %s14, 0
    %p88 = por %p86, %p87
    %p89 = scmp.le.s32.totalorder 1, %s8
    %p90 = scmp.lt.s32.totalorder %s8, 3
    %p91 = pnand %p89, %p90
    %p92 = pneg %p91
    // Predicated region
    $region9: #{tpu_custom_call.1} parent=5 // pred_check
      _
    $region10: #{tpu_custom_call.1} parent=5 // pred_check_branch
      %94 = sbr.rel (%p91) target = $region12
    $region11: #{tpu_custom_call.1} parent=5 // pred_region
      %s95 = ssub.s32 %s8, 1
      // Predicated region
      $region13: #{tpu_custom_call.1} parent=11 // pred_check
        %p96 = pneg %p29
      $region14: #{tpu_custom_call.1} parent=11 // pred_check_branch
        %98 = sbr.rel (%p96) target = $region16
      $region15: #{tpu_custom_call.1} parent=11 // pred_region
        _
      $region16: #{tpu_custom_call.1} parent=11 // pred_fallthru
        _
    $region12: #{tpu_custom_call.1} parent=5 // pred_fallthru
      _
    %p99 = scmp.lt.s32.totalorder %s8, 2
    // Predicated region
    $region17: #{tpu_custom_call.1} parent=5 // pred_check
      %p100 = pneg %p99
    $region18: #{tpu_custom_call.1} parent=5 // pred_check_branch
      %102 = sbr.rel (%p100) target = $region20
    $region19: #{tpu_custom_call.1} parent=5 // pred_region
      // Predicated region
      $region21: #{tpu_custom_call.1} parent=19 // pred_check
        %p103 = pneg %p49
      $region22: #{tpu_custom_call.1} parent=19 // pred_check_branch
        %105 = sbr.rel (%p103) target = $region24
      $region23: #{tpu_custom_call.1} parent=19 // pred_region
        %p106 = scmp.lt.s32.totalorder %s8, 1
        %s107 = scalar_select %p106, %s8, 1
        %s108 = smul.addr %s107, 4
        %s109 = scalar_lea.vmem %s1, %s108
      $region24: #{tpu_custom_call.1} parent=19 // pred_fallthru
        _
    $region20: #{tpu_custom_call.1} parent=5 // pred_fallthru
      _
    %p110 = scmp.le.s32.totalorder 1, %s8
    %p111 = scmp.lt.s32.totalorder %s8, 3
    %p112 = pnand %p110, %p111
    %p113 = pneg %p112
    // Predicated region
    $region25: #{tpu_custom_call.1} parent=5 // pred_check
      _
    $region26: #{tpu_custom_call.1} parent=5 // pred_check_branch
      %115 = sbr.rel (%p112) target = $region28
    $region27: #{tpu_custom_call.1} parent=5 // pred_region
      %s116 = ssub.s32 %s8, 1
      %p117 = pneg %p29
      %p118 = pneg %p26
      %p119 = scmp.lt.s32.totalorder %s13, 1
      %s120 = scalar_select %p119, %s13, 1
      %s121 = smul.addr %s120, 4
      %s122 = scalar_lea.vmem %s1, %s121
      %p123 = pneg %p55
      %p124 = pneg %p52
      %p125 = pneg %p81
      %p126 = pneg %p78
      %p127 = scmp.lt.s32.totalorder %s13, 1
      %s128 = scalar_select %p127, %s13, 1
      %s129 = smul.addr %s128, 8
      %s130 = scalar_lea.vmem %s2, %s129
      %p131 = scmp.lt.s32.totalorder %s13, 1
      %s132 = scalar_select %p131, %s13, 1
      %s133 = smul.addr %s132, 4
      %s134 = scalar_lea.vmem %s1, %s133
      %p135 = scmp.lt.s32.totalorder %s13, 1
      %s136 = scalar_select %p135, %s13, 1
      %s137 = smul.addr %s136, 8
      %s138 = scalar_lea.vmem %s2, %s137
      %v139 = vld [vmem:[%s0] sm:$0xff]
      %141 = vset.pattern.permute.xlu0 0
      %142 = vperm.xlu0 %141, %v139
      %v143 = vpop.permute.xlu0 %142
      %v145 = vld [vmem:[%s134] sm:$0xf]
      %v146 = vperm.slane %v145, 0
      %v147 = vmul.f32 %v143, %v146
      %v148 = vand.u32 2147483647, %v147
      %vm149 = vcmp.le.f32.partialorder %v148, 0.7853982
      %vm150 = vcmp.lt.s32.totalorder %v147, 0
      %v151 = vand.u32 %v147, 2139095040
      %v152 = vshrl.u32 %v151, 23
      %v153 = vsub.s32 %v152, 127
      %v154 = vand.u32 2147483647, %v147
      %v155 = vand.u32 %v154, 8388607
      %v156 = vor.u32 %v155, 8388608
      %v157 = vsub.s32 0, %v156
      %v158 = vadd.s32 %v153, 1
      %vm159 = vcmp.gt.s32.totalorder %v158, 0
      %v160 = vsel %vm159, %v158, 0
      %v161 = vshrl.u32 %v160, 5
      %v162 = vand.u32 %v160, 31
      %v163 = vsub.s32 32, %v162
      %v164 = vshrl.u32 683565275, %v163
      %v165 = vshll.u32 683565275, %v162
      %v166 = vshrl.u32 2475754826, %v163
      %v167 = vor.u32 %v165, %v166
      %v168 = vshll.u32 2475754826, %v162
      %v169 = vshrl.u32 2131351028, %v163
      %v170 = vor.u32 %v168, %v169
      %v171 = vshll.u32 2131351028, %v162
      %v172 = vshrl.u32 2102212464, %v163
      %v173 = vor.u32 %v171, %v172
      %v174 = vshll.u32 2102212464, %v162
      %v175 = vshrl.u32 920167782, %v163
      %v176 = vor.u32 %v174, %v175
      %v177 = vshll.u32 920167782, %v162
      %v178 = vshrl.u32 1326507024, %v163
      %v179 = vor.u32 %v177, %v178
      %vm180 = vcmp.lt.s32.totalorder %v161, 1
      %vm181 = vcmp.lt.s32.totalorder %v161, 2
      %vm182 = vcmp.lt.s32.totalorder %v161, 3
      %vm183 = vcmp.lt.s32.totalorder %v161, 4
      %v184 = vsel %vm180, %v164, %v167
      %v185 = vsel %vm183, %v173, 2102212464
      %v186 = vsel %vm182, %v170, %v185
      %v187 = vsel %vm181, %v184, %v186
      %v188 = vsel %vm180, %v167, %v170
      %v189 = vsel %vm183, %v176, 920167782
      %v190 = vsel %vm182, %v173, %v189
      %v191 = vsel %vm181, %v188, %v190
      %v192 = vsel %vm180, %v170, %v173
      %v193 = vsel %vm183, %v179, 1326507024
      %v194 = vsel %vm182, %v176, %v193
      %v195 = vsel %vm181, %v192, %v194
      %v196 = vshll.u32 %v156, 8
      %v197 = vand.u32 %v196, 65535
      %v198 = vshrl.u32 %v196, 16
      %v199 = vand.u32 %v195, 65535
      %v200 = vshrl.u32 %v195, 16
      %v201 = vmul.u32 %v197, %v199
      %v202 = vmul.u32 %v197, %v200
      %v203 = vmul.u32 %v198, %v199
      %v204 = vmul.u32 %v198, %v200
      %v205 = vshll.u32 %v202, 16
      %v206 = vshrl.u32 %v202, 16
      %v207 = vshll.u32 %v203, 16
      %v208 = vshrl.u32 %v203, 16
      %vm209 = vc.u32 %v201, %v205
      %v210 = vsel %vm209, 1, 0
      %v211 = vadd.s32 %v201, %v205
      %v212 = vadd.s32 %v204, %v210
      %vm213 = vc.u32 %v211, %v207
      %v214 = vsel %vm213, 1, 0
      %v215 = vadd.s32 %v211, %v207
      %v216 = vadd.s32 %v212, %v214
      %v217 = vadd.s32 %v216, %v206
      %v218 = vadd.s32 %v217, %v208
      %v219 = vand.u32 %v196, 65535
      %v220 = vshrl.u32 %v196, 16
      %v221 = vand.u32 %v191, 65535
      %v222 = vshrl.u32 %v191, 16
      %v223 = vmul.u32 %v219, %v221
      %v224 = vmul.u32 %v219, %v222
      %v225 = vmul.u32 %v220, %v221
      %v226 = vmul.u32 %v220, %v222
      %v227 = vshll.u32 %v224, 16
      %v228 = vshrl.u32 %v224, 16
      %v229 = vshll.u32 %v225, 16
      %v230 = vshrl.u32 %v225, 16
      %vm231 = vc.u32 %v223, %v227
      %v232 = vsel %vm231, 1, 0
      %v233 = vadd.s32 %v223, %v227
      %v234 = vadd.s32 %v226, %v232
      %vm235 = vc.u32 %v233, %v229
      %v236 = vsel %vm235, 1, 0
      %v237 = vadd.s32 %v233, %v229
      %v238 = vadd.s32 %v234, %v236
      %v239 = vadd.s32 %v238, %v228
      %v240 = vadd.s32 %v239, %v230
      %v241 = vmul.u32 %v196, %v187
      %v242 = vadd.s32 %v218, %v237
      %vm243 = vc.u32 %v218, %v237
      %v244 = vadd.s32 %v240, 1
      %v245 = vsel %vm243, %v244, %v240
      %v246 = vadd.s32 %v241, %v245
      %v247 = vadd.s32 %v246, 536870912
      %v248 = vshrl.u32 %v247, 30
      %v249 = vshll.u32 %v248, 30
      %v250 = vsub.s32 %v246, %v249
      %vm251 = vcmp.lt.s32.totalorder %v250, 0
      %v252 = vsub.s32 0, %v250
      %v253 = vsel %vm251, %v252, %v250
      %v254 = vclz %v253
      %v255 = vsub.s32 %v254, 2
      %vm256 = vcmp.gt.s32.totalorder 0, %v255
      %v257 = vsel %vm256, 0, %v255
      %v258 = vsub.s32 32, %v257
      %v259 = vshll.u32 %v250, %v257
      %v260 = vshrl.u32 %v242, %v258
      %v261 = vor.u32 %v259, %v260
      %v262 = vsub.s32 4294967266, %v257
      %v263 = vadd.s32 %v262, 127
      %v264 = vshll.u32 %v263, 23
      %v265 = vor.u32 4788187, %v264
      %v266 = vand.u32 2147483647, %v265
      %v268 = vcvt.s32.f32 %v261
      %v269 = vmul.f32 %v268, %v266
      %v270 = vxor.u32 %v269, 2147483648
      %v271 = vsel %vm150, %v270, %v269
      %v272 = vsub.s32 4, %v248
      %v273 = vsel %vm150, %v272, %v248
      %v274 = vsel %vm149, %v147, %v271
      %v275 = vsel %vm149, 0, %v273
      %v276 = vmul.f32 %v274, %v274
      %v277 = vmul.f32 %v276, -0.001358992
      %v278 = vadd.f32 %v277, 0.041655596
      %v279 = vmul.f32 %v276, %v278
      %v280 = vadd.f32 %v279, -0.4999988
      %v281 = vmul.f32 %v276, %v280
      %v282 = vadd.f32 1.0, %v281
      %v283 = vmul.f32 %v274, %v274
      %v284 = vmul.f32 %v283, -0.00019511016
      %v285 = vadd.f32 %v284, 0.008332121
      %v286 = vmul.f32 %v283, %v285
      %v287 = vadd.f32 %v286, -0.16666654
      %v288 = vmul.f32 %v283, %v287
      %v289 = vadd.f32 %v288, 1.0
      %v290 = vmul.f32 %v289, %v274
      %vm291 = vweird.f32 %v147
      %v292 = vadd.s32 %v275, 3
      %v293 = vand.u32 %v292, 3
      %vm294 = vcmp.lt.s32.totalorder %v293, 2
      %vm295 = vcmp.eq.s32.totalorder %v293, 0
      %v296 = vxor.u32 %v290, 2147483648
      %v297 = vsel %vm295, %v282, %v296
      %vm298 = vcmp.eq.s32.totalorder %v293, 2
      %v299 = vxor.u32 %v282, 2147483648
      %v300 = vsel %vm298, %v299, %v290
      %v301 = vsel %vm294, %v297, %v300
      %v302 = vsel %vm291, nan, %v301
      %v303 = vand.u32 2147483647, %v147
      %vm304 = vcmp.le.f32.partialorder %v303, 0.7853982
      %vm305 = vcmp.lt.s32.totalorder %v147, 0
      %v306 = vand.u32 %v147, 2139095040
      %v307 = vshrl.u32 %v306, 23
      %v308 = vsub.s32 %v307, 127
      %v309 = vand.u32 2147483647, %v147
      %v310 = vand.u32 %v309, 8388607
      %v311 = vor.u32 %v310, 8388608
      %v312 = vsub.s32 0, %v311
      %v313 = vadd.s32 %v308, 1
      %vm314 = vcmp.gt.s32.totalorder %v313, 0
      %v315 = vsel %vm314, %v313, 0
      %v316 = vshrl.u32 %v315, 5
      %v317 = vand.u32 %v315, 31
      %v318 = vsub.s32 32, %v317
      %v319 = vshrl.u32 683565275, %v318
      %v320 = vshll.u32 683565275, %v317
      %v321 = vshrl.u32 2475754826, %v318
      %v322 = vor.u32 %v320, %v321
      %v323 = vshll.u32 2475754826, %v317
      %v324 = vshrl.u32 2131351028, %v318
      %v325 = vor.u32 %v323, %v324
      %v326 = vshll.u32 2131351028, %v317
      %v327 = vshrl.u32 2102212464, %v318
      %v328 = vor.u32 %v326, %v327
      %v329 = vshll.u32 2102212464, %v317
      %v330 = vshrl.u32 920167782, %v318
      %v331 = vor.u32 %v329, %v330
      %v332 = vshll.u32 920167782, %v317
      %v333 = vshrl.u32 1326507024, %v318
      %v334 = vor.u32 %v332, %v333
      %vm335 = vcmp.lt.s32.totalorder %v316, 1
      %vm336 = vcmp.lt.s32.totalorder %v316, 2
      %vm337 = vcmp.lt.s32.totalorder %v316, 3
      %vm338 = vcmp.lt.s32.totalorder %v316, 4
      %v339 = vsel %vm335, %v319, %v322
      %v340 = vsel %vm338, %v328, 2102212464
      %v341 = vsel %vm337, %v325, %v340
      %v342 = vsel %vm336, %v339, %v341
      %v343 = vsel %vm335, %v322, %v325
      %v344 = vsel %vm338, %v331, 920167782
      %v345 = vsel %vm337, %v328, %v344
      %v346 = vsel %vm336, %v343, %v345
      %v347 = vsel %vm335, %v325, %v328
      %v348 = vsel %vm338, %v334, 1326507024
      %v349 = vsel %vm337, %v331, %v348
      %v350 = vsel %vm336, %v347, %v349
      %v351 = vshll.u32 %v311, 8
      %v352 = vand.u32 %v351, 65535
      %v353 = vshrl.u32 %v351, 16
      %v354 = vand.u32 %v350, 65535
      %v355 = vshrl.u32 %v350, 16
      %v356 = vmul.u32 %v352, %v354
      %v357 = vmul.u32 %v352, %v355
      %v358 = vmul.u32 %v353, %v354
      %v359 = vmul.u32 %v353, %v355
      %v360 = vshll.u32 %v357, 16
      %v361 = vshrl.u32 %v357, 16
      %v362 = vshll.u32 %v358, 16
      %v363 = vshrl.u32 %v358, 16
      %vm364 = vc.u32 %v356, %v360
      %v365 = vsel %vm364, 1, 0
      %v366 = vadd.s32 %v356, %v360
      %v367 = vadd.s32 %v359, %v365
      %vm368 = vc.u32 %v366, %v362
      %v369 = vsel %vm368, 1, 0
      %v370 = vadd.s32 %v366, %v362
      %v371 = vadd.s32 %v367, %v369
      %v372 = vadd.s32 %v371, %v361
      %v373 = vadd.s32 %v372, %v363
      %v374 = vand.u32 %v351, 65535
      %v375 = vshrl.u32 %v351, 16
      %v376 = vand.u32 %v346, 65535
      %v377 = vshrl.u32 %v346, 16
      %v378 = vmul.u32 %v374, %v376
      %v379 = vmul.u32 %v374, %v377
      %v380 = vmul.u32 %v375, %v376
      %v381 = vmul.u32 %v375, %v377
      %v382 = vshll.u32 %v379, 16
      %v383 = vshrl.u32 %v379, 16
      %v384 = vshll.u32 %v380, 16
      %v385 = vshrl.u32 %v380, 16
      %vm386 = vc.u32 %v378, %v382
      %v387 = vsel %vm386, 1, 0
      %v388 = vadd.s32 %v378, %v382
      %v389 = vadd.s32 %v381, %v387
      %vm390 = vc.u32 %v388, %v384
      %v391 = vsel %vm390, 1, 0
      %v392 = vadd.s32 %v388, %v384
      %v393 = vadd.s32 %v389, %v391
      %v394 = vadd.s32 %v393, %v383
      %v395 = vadd.s32 %v394, %v385
      %v396 = vmul.u32 %v351, %v342
      %v397 = vadd.s32 %v373, %v392
      %vm398 = vc.u32 %v373, %v392
      %v399 = vadd.s32 %v395, 1
      %v400 = vsel %vm398, %v399, %v395
      %v401 = vadd.s32 %v396, %v400
      %v402 = vadd.s32 %v401, 536870912
      %v403 = vshrl.u32 %v402, 30
      %v404 = vshll.u32 %v403, 30
      %v405 = vsub.s32 %v401, %v404
      %vm406 = vcmp.lt.s32.totalorder %v405, 0
      %v407 = vsub.s32 0, %v405
      %v408 = vsel %vm406, %v407, %v405
      %v409 = vclz %v408
      %v410 = vsub.s32 %v409, 2
      %vm411 = vcmp.gt.s32.totalorder 0, %v410
      %v412 = vsel %vm411, 0, %v410
      %v413 = vsub.s32 32, %v412
      %v414 = vshll.u32 %v405, %v412
      %v415 = vshrl.u32 %v397, %v413
      %v416 = vor.u32 %v414, %v415
      %v417 = vsub.s32 4294967266, %v412
      %v418 = vadd.s32 %v417, 127
      %v419 = vshll.u32 %v418, 23
      %v420 = vor.u32 4788187, %v419
      %v421 = vand.u32 2147483647, %v420
      %v423 = vcvt.s32.f32 %v416
      %v424 = vmul.f32 %v423, %v421
      %v425 = vxor.u32 %v424, 2147483648
      %v426 = vsel %vm305, %v425, %v424
      %v427 = vsub.s32 4, %v403
      %v428 = vsel %vm305, %v427, %v403
      %v429 = vsel %vm304, %v147, %v426
      %v430 = vsel %vm304, 0, %v428
      %v431 = vmul.f32 %v429, %v429
      %v432 = vmul.f32 %v431, -0.001358992
      %v433 = vadd.f32 %v432, 0.041655596
      %v434 = vmul.f32 %v431, %v433
      %v435 = vadd.f32 %v434, -0.4999988
      %v436 = vmul.f32 %v431, %v435
      %v437 = vadd.f32 1.0, %v436
      %v438 = vmul.f32 %v429, %v429
      %v439 = vmul.f32 %v438, -0.00019511016
      %v440 = vadd.f32 %v439, 0.008332121
      %v441 = vmul.f32 %v438, %v440
      %v442 = vadd.f32 %v441, -0.16666654
      %v443 = vmul.f32 %v438, %v442
      %v444 = vadd.f32 %v443, 1.0
      %v445 = vmul.f32 %v444, %v429
      %vm446 = vweird.f32 %v147
      %v447 = vand.u32 %v430, 3
      %vm448 = vcmp.lt.s32.totalorder %v447, 2
      %vm449 = vcmp.eq.s32.totalorder %v447, 0
      %v450 = vxor.u32 %v445, 2147483648
      %v451 = vsel %vm449, %v437, %v450
      %vm452 = vcmp.eq.s32.totalorder %v447, 2
      %v453 = vxor.u32 %v437, 2147483648
      %v454 = vsel %vm452, %v453, %v445
      %v455 = vsel %vm448, %v451, %v454
      %v456 = vsel %vm446, nan, %v455
      %v457 = vmul.f32 %v145, 1.5435857
      %v458 = vand.u32 2147483647, %v457
      %vm459 = vcmp.le.f32.partialorder %v458, 0.7853982
      %vm460 = vcmp.lt.s32.totalorder %v457, 0
      %v461 = vand.u32 %v457, 2139095040
      %v462 = vshrl.u32 %v461, 23
      %v463 = vsub.s32 %v462, 127
      %v464 = vand.u32 2147483647, %v457
      %v465 = vand.u32 %v464, 8388607
      %v466 = vor.u32 %v465, 8388608
      %v467 = vsub.s32 0, %v466
      %v468 = vadd.s32 %v463, 1
      %vm469 = vcmp.gt.s32.totalorder %v468, 0
      %v470 = vsel %vm469, %v468, 0
      %v471 = vshrl.u32 %v470, 5
      %v472 = vand.u32 %v470, 31
      %v473 = vsub.s32 32, %v472
      %v474 = vshrl.u32 683565275, %v473
      %v475 = vshll.u32 683565275, %v472
      %v476 = vshrl.u32 2475754826, %v473
      %v477 = vor.u32 %v475, %v476
      %v478 = vshll.u32 2475754826, %v472
      %v479 = vshrl.u32 2131351028, %v473
      %v480 = vor.u32 %v478, %v479
      %v481 = vshll.u32 2131351028, %v472
      %v482 = vshrl.u32 2102212464, %v473
      %v483 = vor.u32 %v481, %v482
      %v484 = vshll.u32 2102212464, %v472
      %v485 = vshrl.u32 920167782, %v473
      %v486 = vor.u32 %v484, %v485
      %v487 = vshll.u32 920167782, %v472
      %v488 = vshrl.u32 1326507024, %v473
      %v489 = vor.u32 %v487, %v488
      %vm490 = vcmp.lt.s32.totalorder %v471, 1
      %vm491 = vcmp.lt.s32.totalorder %v471, 2
      %vm492 = vcmp.lt.s32.totalorder %v471, 3
      %vm493 = vcmp.lt.s32.totalorder %v471, 4
      %v494 = vsel %vm490, %v474, %v477
      %v495 = vsel %vm493, %v483, 2102212464
      %v496 = vsel %vm492, %v480, %v495
      %v497 = vsel %vm491, %v494, %v496
      %v498 = vsel %vm490, %v477, %v480
      %v499 = vsel %vm493, %v486, 920167782
      %v500 = vsel %vm492, %v483, %v499
      %v501 = vsel %vm491, %v498, %v500
      %v502 = vsel %vm490, %v480, %v483
      %v503 = vsel %vm493, %v489, 1326507024
      %v504 = vsel %vm492, %v486, %v503
      %v505 = vsel %vm491, %v502, %v504
      %v506 = vshll.u32 %v466, 8
      %v507 = vand.u32 %v506, 65535
      %v508 = vshrl.u32 %v506, 16
      %v509 = vand.u32 %v505, 65535
      %v510 = vshrl.u32 %v505, 16
      %v511 = vmul.u32 %v507, %v509
      %v512 = vmul.u32 %v507, %v510
      %v513 = vmul.u32 %v508, %v509
      %v514 = vmul.u32 %v508, %v510
      %v515 = vshll.u32 %v512, 16
      %v516 = vshrl.u32 %v512, 16
      %v517 = vshll.u32 %v513, 16
      %v518 = vshrl.u32 %v513, 16
      %vm519 = vc.u32 %v511, %v515
      %v520 = vsel %vm519, 1, 0
      %v521 = vadd.s32 %v511, %v515
      %v522 = vadd.s32 %v514, %v520
      %vm523 = vc.u32 %v521, %v517
      %v524 = vsel %vm523, 1, 0
      %v525 = vadd.s32 %v521, %v517
      %v526 = vadd.s32 %v522, %v524
      %v527 = vadd.s32 %v526, %v516
      %v528 = vadd.s32 %v527, %v518
      %v529 = vand.u32 %v506, 65535
      %v530 = vshrl.u32 %v506, 16
      %v531 = vand.u32 %v501, 65535
      %v532 = vshrl.u32 %v501, 16
      %v533 = vmul.u32 %v529, %v531
      %v534 = vmul.u32 %v529, %v532
      %v535 = vmul.u32 %v530, %v531
      %v536 = vmul.u32 %v530, %v532
      %v537 = vshll.u32 %v534, 16
      %v538 = vshrl.u32 %v534, 16
      %v539 = vshll.u32 %v535, 16
      %v540 = vshrl.u32 %v535, 16
      %vm541 = vc.u32 %v533, %v537
      %v542 = vsel %vm541, 1, 0
      %v543 = vadd.s32 %v533, %v537
      %v544 = vadd.s32 %v536, %v542
      %vm545 = vc.u32 %v543, %v539
      %v546 = vsel %vm545, 1, 0
      %v547 = vadd.s32 %v543, %v539
      %v548 = vadd.s32 %v544, %v546
      %v549 = vadd.s32 %v548, %v538
      %v550 = vadd.s32 %v549, %v540
      %v551 = vmul.u32 %v506, %v497
      %v552 = vadd.s32 %v528, %v547
      %vm553 = vc.u32 %v528, %v547
      %v554 = vadd.s32 %v550, 1
      %v555 = vsel %vm553, %v554, %v550
      %v556 = vadd.s32 %v551, %v555
      %v557 = vadd.s32 %v556, 536870912
      %v558 = vshrl.u32 %v557, 30
      %v559 = vshll.u32 %v558, 30
      %v560 = vsub.s32 %v556, %v559
      %vm561 = vcmp.lt.s32.totalorder %v560, 0
      %v562 = vsub.s32 0, %v560
      %v563 = vsel %vm561, %v562, %v560
      %v564 = vclz %v563
      %v565 = vsub.s32 %v564, 2
      %vm566 = vcmp.gt.s32.totalorder 0, %v565
      %v567 = vsel %vm566, 0, %v565
      %v568 = vsub.s32 32, %v567
      %v569 = vshll.u32 %v560, %v567
      %v570 = vshrl.u32 %v552, %v568
      %v571 = vor.u32 %v569, %v570
      %v572 = vsub.s32 4294967266, %v567
      %v573 = vadd.s32 %v572, 127
      %v574 = vshll.u32 %v573, 23
      %v575 = vor.u32 4788187, %v574
      %v576 = vand.u32 2147483647, %v575
      %v578 = vcvt.s32.f32 %v571
      %v579 = vmul.f32 %v578, %v576
      %v580 = vxor.u32 %v579, 2147483648
      %v581 = vsel %vm460, %v580, %v579
      %v582 = vsub.s32 4, %v558
      %v583 = vsel %vm460, %v582, %v558
      %v584 = vsel %vm459, %v457, %v581
      %v585 = vsel %vm459, 0, %v583
      %v586 = vmul.f32 %v584, %v584
      %v587 = vmul.f32 %v586, -0.001358992
      %v588 = vadd.f32 %v587, 0.041655596
      %v589 = vmul.f32 %v586, %v588
      %v590 = vadd.f32 %v589, -0.4999988
      %v591 = vmul.f32 %v586, %v590
      %v592 = vadd.f32 1.0, %v591
      %v593 = vmul.f32 %v584, %v584
      %v594 = vmul.f32 %v593, -0.00019511016
      %v595 = vadd.f32 %v594, 0.008332121
      %v596 = vmul.f32 %v593, %v595
      %v597 = vadd.f32 %v596, -0.16666654
      %v598 = vmul.f32 %v593, %v597
      %v599 = vadd.f32 %v598, 1.0
      %v600 = vmul.f32 %v599, %v584
      %vm601 = vweird.f32 %v457
      %v602 = vadd.s32 %v585, 3
      %v603 = vand.u32 %v602, 3
      %vm604 = vcmp.lt.s32.totalorder %v603, 2
      %vm605 = vcmp.eq.s32.totalorder %v603, 0
      %v606 = vxor.u32 %v600, 2147483648
      %v607 = vsel %vm605, %v592, %v606
      %vm608 = vcmp.eq.s32.totalorder %v603, 2
      %v609 = vxor.u32 %v592, 2147483648
      %v610 = vsel %vm608, %v609, %v600
      %v611 = vsel %vm604, %v607, %v610
      %v612 = vsel %vm601, nan, %v611
      %v613 = vand.u32 2147483647, %v457
      %vm614 = vcmp.le.f32.partialorder %v613, 0.7853982
      %vm615 = vcmp.lt.s32.totalorder %v457, 0
      %v616 = vand.u32 %v457, 2139095040
      %v617 = vshrl.u32 %v616, 23
      %v618 = vsub.s32 %v617, 127
      %v619 = vand.u32 2147483647, %v457
      %v620 = vand.u32 %v619, 8388607
      %v621 = vor.u32 %v620, 8388608
      %v622 = vsub.s32 0, %v621
      %v623 = vadd.s32 %v618, 1
      %vm624 = vcmp.gt.s32.totalorder %v623, 0
      %v625 = vsel %vm624, %v623, 0
      %v626 = vshrl.u32 %v625, 5
      %v627 = vand.u32 %v625, 31
      %v628 = vsub.s32 32, %v627
      %v629 = vshrl.u32 683565275, %v628
      %v630 = vshll.u32 683565275, %v627
      %v631 = vshrl.u32 2475754826, %v628
      %v632 = vor.u32 %v630, %v631
      %v633 = vshll.u32 2475754826, %v627
      %v634 = vshrl.u32 2131351028, %v628
      %v635 = vor.u32 %v633, %v634
      %v636 = vshll.u32 2131351028, %v627
      %v637 = vshrl.u32 2102212464, %v628
      %v638 = vor.u32 %v636, %v637
      %v639 = vshll.u32 2102212464, %v627
      %v640 = vshrl.u32 920167782, %v628
      %v641 = vor.u32 %v639, %v640
      %v642 = vshll.u32 920167782, %v627
      %v643 = vshrl.u32 1326507024, %v628
      %v644 = vor.u32 %v642, %v643
      %vm645 = vcmp.lt.s32.totalorder %v626, 1
      %vm646 = vcmp.lt.s32.totalorder %v626, 2
      %vm647 = vcmp.lt.s32.totalorder %v626, 3
      %vm648 = vcmp.lt.s32.totalorder %v626, 4
      %v649 = vsel %vm645, %v629, %v632
      %v650 = vsel %vm648, %v638, 2102212464
      %v651 = vsel %vm647, %v635, %v650
      %v652 = vsel %vm646, %v649, %v651
      %v653 = vsel %vm645, %v632, %v635
      %v654 = vsel %vm648, %v641, 920167782
      %v655 = vsel %vm647, %v638, %v654
      %v656 = vsel %vm646, %v653, %v655
      %v657 = vsel %vm645, %v635, %v638
      %v658 = vsel %vm648, %v644, 1326507024
      %v659 = vsel %vm647, %v641, %v658
      %v660 = vsel %vm646, %v657, %v659
      %v661 = vshll.u32 %v621, 8
      %v662 = vand.u32 %v661, 65535
      %v663 = vshrl.u32 %v661, 16
      %v664 = vand.u32 %v660, 65535
      %v665 = vshrl.u32 %v660, 16
      %v666 = vmul.u32 %v662, %v664
      %v667 = vmul.u32 %v662, %v665
      %v668 = vmul.u32 %v663, %v664
      %v669 = vmul.u32 %v663, %v665
      %v670 = vshll.u32 %v667, 16
      %v671 = vshrl.u32 %v667, 16
      %v672 = vshll.u32 %v668, 16
      %v673 = vshrl.u32 %v668, 16
      %vm674 = vc.u32 %v666, %v670
      %v675 = vsel %vm674, 1, 0
      %v676 = vadd.s32 %v666, %v670
      %v677 = vadd.s32 %v669, %v675
      %vm678 = vc.u32 %v676, %v672
      %v679 = vsel %vm678, 1, 0
      %v680 = vadd.s32 %v676, %v672
      %v681 = vadd.s32 %v677, %v679
      %v682 = vadd.s32 %v681, %v671
      %v683 = vadd.s32 %v682, %v673
      %v684 = vand.u32 %v661, 65535
      %v685 = vshrl.u32 %v661, 16
      %v686 = vand.u32 %v656, 65535
      %v687 = vshrl.u32 %v656, 16
      %v688 = vmul.u32 %v684, %v686
      %v689 = vmul.u32 %v684, %v687
      %v690 = vmul.u32 %v685, %v686
      %v691 = vmul.u32 %v685, %v687
      %v692 = vshll.u32 %v689, 16
      %v693 = vshrl.u32 %v689, 16
      %v694 = vshll.u32 %v690, 16
      %v695 = vshrl.u32 %v690, 16
      %vm696 = vc.u32 %v688, %v692
      %v697 = vsel %vm696, 1, 0
      %v698 = vadd.s32 %v688, %v692
      %v699 = vadd.s32 %v691, %v697
      %vm700 = vc.u32 %v698, %v694
      %v701 = vsel %vm700, 1, 0
      %v702 = vadd.s32 %v698, %v694
      %v703 = vadd.s32 %v699, %v701
      %v704 = vadd.s32 %v703, %v693
      %v705 = vadd.s32 %v704, %v695
      %v706 = vmul.u32 %v661, %v652
      %v707 = vadd.s32 %v683, %v702
      %vm708 = vc.u32 %v683, %v702
      %v709 = vadd.s32 %v705, 1
      %v710 = vsel %vm708, %v709, %v705
      %v711 = vadd.s32 %v706, %v710
      %v712 = vadd.s32 %v711, 536870912
      %v713 = vshrl.u32 %v712, 30
      %v714 = vshll.u32 %v713, 30
      %v715 = vsub.s32 %v711, %v714
      %vm716 = vcmp.lt.s32.totalorder %v715, 0
      %v717 = vsub.s32 0, %v715
      %v718 = vsel %vm716, %v717, %v715
      %v719 = vclz %v718
      %v720 = vsub.s32 %v719, 2
      %vm721 = vcmp.gt.s32.totalorder 0, %v720
      %v722 = vsel %vm721, 0, %v720
      %v723 = vsub.s32 32, %v722
      %v724 = vshll.u32 %v715, %v722
      %v725 = vshrl.u32 %v707, %v723
      %v726 = vor.u32 %v724, %v725
      %v727 = vsub.s32 4294967266, %v722
      %v728 = vadd.s32 %v727, 127
      %v729 = vshll.u32 %v728, 23
      %v730 = vor.u32 4788187, %v729
      %v731 = vand.u32 2147483647, %v730
      %v733 = vcvt.s32.f32 %v726
      %v734 = vmul.f32 %v733, %v731
      %v735 = vxor.u32 %v734, 2147483648
      %v736 = vsel %vm615, %v735, %v734
      %v737 = vsub.s32 4, %v713
      %v738 = vsel %vm615, %v737, %v713
      %v739 = vsel %vm614, %v457, %v736
      %v740 = vsel %vm614, 0, %v738
      %v741 = vmul.f32 %v739, %v739
      %v742 = vmul.f32 %v741, -0.001358992
      %v743 = vadd.f32 %v742, 0.041655596
      %v744 = vmul.f32 %v741, %v743
      %v745 = vadd.f32 %v744, -0.4999988
      %v746 = vmul.f32 %v741, %v745
      %v747 = vadd.f32 1.0, %v746
      %v748 = vmul.f32 %v739, %v739
      %v749 = vmul.f32 %v748, -0.00019511016
      %v750 = vadd.f32 %v749, 0.008332121
      %v751 = vmul.f32 %v748, %v750
      %v752 = vadd.f32 %v751, -0.16666654
      %v753 = vmul.f32 %v748, %v752
      %v754 = vadd.f32 %v753, 1.0
      %v755 = vmul.f32 %v754, %v739
      %vm756 = vweird.f32 %v457
      %v757 = vand.u32 %v740, 3
      %vm758 = vcmp.lt.s32.totalorder %v757, 2
      %vm759 = vcmp.eq.s32.totalorder %v757, 0
      %v760 = vxor.u32 %v755, 2147483648
      %v761 = vsel %vm759, %v747, %v760
      %vm762 = vcmp.eq.s32.totalorder %v757, 2
      %v763 = vxor.u32 %v747, 2147483648
      %v764 = vsel %vm762, %v763, %v755
      %v765 = vsel %vm758, %v761, %v764
      %v766 = vsel %vm756, nan, %v765
      %767 = vst [vmem:[#allocation2] sm:$0xff] %v302
      %768 = vst [vmem:[#allocation2 + $0x80] sm:$0xff] %v456
      %v769 = vperm.slane %v766, 0
      %v770 = vmul.f32 %v302, %v769
      %v771 = vperm.slane %v612, 0
      %v772 = vmul.f32 %v456, %v771
      %v773 = vadd.f32 %v770, %v772
      %v774 = vmul.f32 %v456, %v769
      %v775 = vmul.f32 %v302, %v771
      %v776 = vsub.f32 %v774, %v775
      %777 = vst [vmem:[#allocation2 + $0x8] sm:$0xff] %v773
      %778 = vst [vmem:[#allocation2 + $0x88] sm:$0xff] %v776
      %v779 = vmul.f32 %v773, %v769
      %v780 = vmul.f32 %v776, %v771
      %v781 = vadd.f32 %v779, %v780
      %v782 = vmul.f32 %v776, %v769
      %v783 = vmul.f32 %v773, %v771
      %v784 = vsub.f32 %v782, %v783
      %785 = vst [vmem:[#allocation2 + $0x10] sm:$0xff] %v781
      %786 = vst [vmem:[#allocation2 + $0x90] sm:$0xff] %v784
      %v787 = vmul.f32 %v781, %v769
      %v788 = vmul.f32 %v784, %v771
      %v789 = vadd.f32 %v787, %v788
      %v790 = vmul.f32 %v784, %v769
      %v791 = vmul.f32 %v781, %v771
      %v792 = vsub.f32 %v790, %v791
      %793 = vst [vmem:[#allocation2 + $0x18] sm:$0xff] %v789
      %794 = vst [vmem:[#allocation2 + $0x98] sm:$0xff] %v792
      %v795 = vmul.f32 %v789, %v769
      %v796 = vmul.f32 %v792, %v771
      %v797 = vadd.f32 %v795, %v796
      %v798 = vmul.f32 %v792, %v769
      %v799 = vmul.f32 %v789, %v771
      %v800 = vsub.f32 %v798, %v799
      %801 = vst [vmem:[#allocation2 + $0x20] sm:$0xff] %v797
      %802 = vst [vmem:[#allocation2 + $0xa0] sm:$0xff] %v800
      %v803 = vmul.f32 %v797, %v769
      %v804 = vmul.f32 %v800, %v771
      %v805 = vadd.f32 %v803, %v804
      %v806 = vmul.f32 %v800, %v769
      %v807 = vmul.f32 %v797, %v771
      %v808 = vsub.f32 %v806, %v807
      %809 = vst [vmem:[#allocation2 + $0x28] sm:$0xff] %v805
      %810 = vst [vmem:[#allocation2 + $0xa8] sm:$0xff] %v808
      %v811 = vmul.f32 %v805, %v769
      %v812 = vmul.f32 %v808, %v771
      %v813 = vadd.f32 %v811, %v812
      %v814 = vmul.f32 %v808, %v769
      %v815 = vmul.f32 %v805, %v771
      %v816 = vsub.f32 %v814, %v815
      %817 = vst [vmem:[#allocation2 + $0x30] sm:$0xff] %v813
      %818 = vst [vmem:[#allocation2 + $0xb0] sm:$0xff] %v816
      %v819 = vmul.f32 %v813, %v769
      %v820 = vmul.f32 %v816, %v771
      %v821 = vadd.f32 %v819, %v820
      %v822 = vmul.f32 %v816, %v769
      %v823 = vmul.f32 %v813, %v771
      %v824 = vsub.f32 %v822, %v823
      %825 = vst [vmem:[#allocation2 + $0x38] sm:$0xff] %v821
      %826 = vst [vmem:[#allocation2 + $0xb8] sm:$0xff] %v824
      %v827 = vmul.f32 %v821, %v769
      %v828 = vmul.f32 %v824, %v771
      %v829 = vadd.f32 %v827, %v828
      %v830 = vmul.f32 %v824, %v769
      %v831 = vmul.f32 %v821, %v771
      %v832 = vsub.f32 %v830, %v831
      %833 = vst [vmem:[#allocation2 + $0x40] sm:$0xff] %v829
      %834 = vst [vmem:[#allocation2 + $0xc0] sm:$0xff] %v832
      %v835 = vmul.f32 %v829, %v769
      %v836 = vmul.f32 %v832, %v771
      %v837 = vadd.f32 %v835, %v836
      %v838 = vmul.f32 %v832, %v769
      %v839 = vmul.f32 %v829, %v771
      %v840 = vsub.f32 %v838, %v839
      %841 = vst [vmem:[#allocation2 + $0x48] sm:$0xff] %v837
      %842 = vst [vmem:[#allocation2 + $0xc8] sm:$0xff] %v840
      %v843 = vmul.f32 %v837, %v769
      %v844 = vmul.f32 %v840, %v771
      %v845 = vadd.f32 %v843, %v844
      %v846 = vmul.f32 %v840, %v769
      %v847 = vmul.f32 %v837, %v771
      %v848 = vsub.f32 %v846, %v847
      %849 = vst [vmem:[#allocation2 + $0x50] sm:$0xff] %v845
      %850 = vst [vmem:[#allocation2 + $0xd0] sm:$0xff] %v848
      %v851 = vmul.f32 %v845, %v769
      %v852 = vmul.f32 %v848, %v771
      %v853 = vadd.f32 %v851, %v852
      %v854 = vmul.f32 %v848, %v769
      %v855 = vmul.f32 %v845, %v771
      %v856 = vsub.f32 %v854, %v855
      %857 = vst [vmem:[#allocation2 + $0x58] sm:$0xff] %v853
      %858 = vst [vmem:[#allocation2 + $0xd8] sm:$0xff] %v856
      %v859 = vmul.f32 %v853, %v769
      %v860 = vmul.f32 %v856, %v771
      %v861 = vadd.f32 %v859, %v860
      %v862 = vmul.f32 %v856, %v769
      %v863 = vmul.f32 %v853, %v771
      %v864 = vsub.f32 %v862, %v863
      %865 = vst [vmem:[#allocation2 + $0x60] sm:$0xff] %v861
      %866 = vst [vmem:[#allocation2 + $0xe0] sm:$0xff] %v864
      %v867 = vmul.f32 %v861, %v769
      %v868 = vmul.f32 %v864, %v771
      %v869 = vadd.f32 %v867, %v868
      %v870 = vmul.f32 %v864, %v769
      %v871 = vmul.f32 %v861, %v771
      %v872 = vsub.f32 %v870, %v871
      %873 = vst [vmem:[#allocation2 + $0x68] sm:$0xff] %v869
      %874 = vst [vmem:[#allocation2 + $0xe8] sm:$0xff] %v872
      %v875 = vmul.f32 %v869, %v769
      %v876 = vmul.f32 %v872, %v771
      %v877 = vadd.f32 %v875, %v876
      %v878 = vmul.f32 %v872, %v769
      %v879 = vmul.f32 %v869, %v771
      %v880 = vsub.f32 %v878, %v879
      %881 = vst [vmem:[#allocation2 + $0x70] sm:$0xff] %v877
      %882 = vst [vmem:[#allocation2 + $0xf0] sm:$0xff] %v880
      %v883 = vmul.f32 %v877, %v769
      %v884 = vmul.f32 %v880, %v771
      %v885 = vadd.f32 %v883, %v884
      %v886 = vmul.f32 %v880, %v769
      %v887 = vmul.f32 %v877, %v771
      %v888 = vsub.f32 %v886, %v887
      %889 = vst [vmem:[#allocation2 + $0x78] sm:$0xff] %v885
      %890 = vst [vmem:[#allocation2 + $0xf8] sm:$0xff] %v888
      %v891 = vld [vmem:[#allocation2] sm:$0xff]
      %v892 = vld [vmem:[#allocation2 + $0x8] sm:$0xff]
      %v893 = vld [vmem:[#allocation2 + $0x10] sm:$0xff]
      %v894 = vld [vmem:[#allocation2 + $0x18] sm:$0xff]
      %v895 = vld [vmem:[#allocation2 + $0x20] sm:$0xff]
      %v896 = vld [vmem:[#allocation2 + $0x28] sm:$0xff]
      %v897 = vld [vmem:[#allocation2 + $0x30] sm:$0xff]
      %v898 = vld [vmem:[#allocation2 + $0x38] sm:$0xff]
      %v899 = vld [vmem:[#allocation2 + $0x40] sm:$0xff]
      %v900 = vld [vmem:[#allocation2 + $0x48] sm:$0xff]
      %v901 = vld [vmem:[#allocation2 + $0x50] sm:$0xff]
      %v902 = vld [vmem:[#allocation2 + $0x58] sm:$0xff]
      %v903 = vld [vmem:[#allocation2 + $0x60] sm:$0xff]
      %v904 = vld [vmem:[#allocation2 + $0x68] sm:$0xff]
      %v905 = vld [vmem:[#allocation2 + $0x70] sm:$0xff]
      %v906 = vld [vmem:[#allocation2 + $0x78] sm:$0xff]
      %v907 = vld [vmem:[#allocation2 + $0x80] sm:$0xff]
      %v908 = vld [vmem:[#allocation2 + $0x88] sm:$0xff]
      %v909 = vld [vmem:[#allocation2 + $0x90] sm:$0xff]
      %v910 = vld [vmem:[#allocation2 + $0x98] sm:$0xff]
      %v911 = vld [vmem:[#allocation2 + $0xa0] sm:$0xff]
      %v912 = vld [vmem:[#allocation2 + $0xa8] sm:$0xff]
      %v913 = vld [vmem:[#allocation2 + $0xb0] sm:$0xff]
      %v914 = vld [vmem:[#allocation2 + $0xb8] sm:$0xff]
      %v915 = vld [vmem:[#allocation2 + $0xc0] sm:$0xff]
      %v916 = vld [vmem:[#allocation2 + $0xc8] sm:$0xff]
      %v917 = vld [vmem:[#allocation2 + $0xd0] sm:$0xff]
      %v918 = vld [vmem:[#allocation2 + $0xd8] sm:$0xff]
      %v919 = vld [vmem:[#allocation2 + $0xe0] sm:$0xff]
      %v920 = vld [vmem:[#allocation2 + $0xe8] sm:$0xff]
      %v921 = vld [vmem:[#allocation2 + $0xf0] sm:$0xff]
      %v922 = vld [vmem:[#allocation2 + $0xf8] sm:$0xff]
      %v924 = vrot.slane %v145, 1
      %926 = vmatpush.xpose.msra.mxu0 %v906
      %927 = vmatpush.xpose.msra.mxu0 %v905
      %928 = vmatpush.xpose.msra.mxu0 %v904
      %929 = vmatpush.xpose.msra.mxu0 %v903
      %930 = vmatpush.xpose.msra.mxu0 %v902
      %931 = vmatpush.xpose.msra.mxu0 %v901
      %932 = vmatpush.xpose.msra.mxu0 %v900
      %933 = vmatpush.xpose.msra.mxu0 %v899
      %934 = vmatpush.xpose.msra.mxu0 %v898
      %935 = vmatpush.xpose.msra.mxu0 %v897
      %936 = vmatpush.xpose.msra.mxu0 %v896
      %937 = vmatpush.xpose.msra.mxu0 %v895
      %938 = vmatpush.xpose.msra.mxu0 %v894
      %939 = vmatpush.xpose.msra.mxu0 %v893
      %940 = vmatpush.xpose.msra.mxu0 %v892
      %941 = vmatpush.xpose.msra.mxu0 %v891
      %942 = vmatmul.f32.gmra.mxu0 %v924
      %v943 = vpop.f32.mrf.mxu0
      %v944 = vadd.f32 0.0, %v943
      %945 = vdwg.mxu0
      %946 = vmatpush.xpose.msra.mxu0 %v922
      %947 = vmatpush.xpose.msra.mxu0 %v921
      %948 = vmatpush.xpose.msra.mxu0 %v920
      %949 = vmatpush.xpose.msra.mxu0 %v919
      %950 = vmatpush.xpose.msra.mxu0 %v918
      %951 = vmatpush.xpose.msra.mxu0 %v917
      %952 = vmatpush.xpose.msra.mxu0 %v916
      %953 = vmatpush.xpose.msra.mxu0 %v915
      %954 = vmatpush.xpose.msra.mxu0 %v914
      %955 = vmatpush.xpose.msra.mxu0 %v913
      %956 = vmatpush.xpose.msra.mxu0 %v912
      %957 = vmatpush.xpose.msra.mxu0 %v911
      %958 = vmatpush.xpose.msra.mxu0 %v910
      %959 = vmatpush.xpose.msra.mxu0 %v909
      %960 = vmatpush.xpose.msra.mxu0 %v908
      %961 = vmatpush.xpose.msra.mxu0 %v907
      %962 = vmatmul.f32.gmra.mxu0 %v924
      %v963 = vpop.f32.mrf.mxu0
      %v964 = vadd.f32 0.0, %v963
      %965 = vdwg.mxu0
      %v967 = vrot.slane %v964, 5
      %vm969 = vcmask 1042432
      %v970 = vsel %vm969, %v944, %v967
      %971 = vst [vmem:[%s138] sm:$0x3f] %v970
      %p972 = scmp.lt.s32.totalorder %s13, 1
      %s973 = scalar_select %p972, %s13, 1
      %s974 = smul.addr %s973, 8
      %s975 = scalar_lea.vmem %s2, %s974
      // Predicated region
      $region29: #{tpu_custom_call.1} parent=27 // pred_check
        %p976 = pneg %p78
      $region30: #{tpu_custom_call.1} parent=27 // pred_check_branch
        %978 = sbr.rel (%p976) target = $region32
      $region31: #{tpu_custom_call.1} parent=27 // pred_region
        _
      $region32: #{tpu_custom_call.1} parent=27 // pred_fallthru
        _
    $region28: #{tpu_custom_call.1} parent=5 // pred_fallthru
      _
    %p979 = scmp.le.s32.totalorder 2, %s8
    // Predicated region
    $region33: #{tpu_custom_call.1} parent=5 // pred_check
      %p980 = pneg %p979
    $region34: #{tpu_custom_call.1} parent=5 // pred_check_branch
      %982 = sbr.rel (%p980) target = $region36
    $region35: #{tpu_custom_call.1} parent=5 // pred_region
      %s983 = ssub.s32 %s8, 2
      // Predicated region
      $region37: #{tpu_custom_call.1} parent=35 // pred_check
        %p984 = pneg %p84
      $region38: #{tpu_custom_call.1} parent=35 // pred_check_branch
        %986 = sbr.rel (%p984) target = $region40
      $region39: #{tpu_custom_call.1} parent=35 // pred_region
        %p987 = scmp.lt.s32.totalorder %s14, 1
        %s988 = scalar_select %p987, %s14, 1
        %s989 = smul.addr %s988, 8
        %s990 = scalar_lea.vmem %s2, %s989
      $region40: #{tpu_custom_call.1} parent=35 // pred_fallthru
        _
    $region36: #{tpu_custom_call.1} parent=5 // pred_fallthru
      _
  $region6: #{tpu_custom_call.1} parent=0 // loop_footer
    %s12 = sadd.s32 1, %s8
  $region7: #{tpu_custom_call.1} parent=0 // loop_footer_branch
    %7 = sbr.rel target = $region3
  $region8: #{tpu_custom_call.1} parent=0 // loop_exit
    _

</llo_original>
